<compile_context>
chip_gen: v7x
topology: tpu7x:2x2x1
jax: 0.10.0
libtpu: 0.0.40
codegen_flags: <defaults>
</compile_context>

<pallas_src>
import functools

import jax
import jax.numpy as jnp
import numpy as np
from jax import lax
from jax.experimental import pallas as pl
from jax.experimental.pallas import tpu as pltpu


_CP = 8  # padded input-channel count -> im2col rows stay sublane(8)-aligned


def _halo_masks(H, W):
    """(9, H*W) float32 validity masks for the 3x3 taps (zero padding = 1)."""
    hh, ww = np.meshgrid(np.arange(H), np.arange(W), indexing="ij")
    masks = np.zeros((9, H * W), np.float32)
    for dy in range(3):
        for dx in range(3):
            valid = ((hh + dy - 1 >= 0) & (hh + dy - 1 < H) &
                     (ww + dx - 1 >= 0) & (ww + dx - 1 < W))
            masks[dy * 3 + dx] = valid.reshape(-1).astype(np.float32)
    return jnp.asarray(masks)


def _pack_conv_weights(w_hwio, cp):
    """HWIO (3,3,Cin,Cout) -> (Cout, 9*cp): tap-major / channel-minor, Cin zero-padded to cp."""
    kh, kw, cin, cout = w_hwio.shape
    w_full = jnp.zeros((kh, kw, cp, cout), w_hwio.dtype).at[:, :, :cin, :].set(w_hwio)
    # column index = (dy*3 + dx) * cp + c   -- matches the im2col row ordering.
    return jnp.transpose(w_full, (3, 0, 1, 2)).reshape(cout, kh * kw * cp)


def _features_kernel(x_ref, mean_ref, istd_ref, mask_ref,
                     w1_ref, b1_ref, w2_ref, b2_ref,
                     o1_ref, o2_ref, x8_ref, col_ref, *, H, W):
    # x_ref   : (1, C0, HW)   raw input (C0 = 3)
    # mean/istd : (C0, 1)     ImageNet mean and 1/std
    # mask_ref: (9, HW)       0/1 halo masks per 3x3 tap
    # w*_ref  : (Cout, 9*_CP) packed conv weights,  b*_ref: (Cout, 1)
    # o*_ref  : (1, Cout, HW) per-layer outputs (lane-dense stores)
    # x8_ref  : (_CP, HW)     VMEM scratch: normalized input widened to 8 channels
    # col_ref : (9*_CP, HW)   VMEM scratch: im2col buffer
    HW = H * W
    C0 = x_ref.shape[1]

    # Fused normalization; widen channels C0 -> _CP in a zeroed scratch so the
    # padded channel rows are exactly 0 (their weight columns are 0 too).
    x8_ref[...] = jnp.zeros_like(x8_ref)
    x8_ref[0:C0, :] = (x_ref[0] - mean_ref[...]) * istd_ref[...]

    def conv3x3_relu(inp, w_ref, b_ref):
        # inp: (_CP, HW).  Build im2col with XLU lane rolls + halo masks, then
        # a single MXU matmul  (Cout, 9*_CP) @ (9*_CP, HW).
        assert inp.shape[0] == _CP
        for dy in range(3):
            for dx in range(3):
                t = dy * 3 + dx
                d = (dy - 1) * W + (dx - 1)          # flat H*W offset of this tap
                shifted = inp if d == 0 else pltpu.roll(inp, shift=(-d) % HW, axis=1)
                col_ref[t * _CP:(t + 1) * _CP, :] = shifted * mask_ref[t:t + 1, :]
        out = jnp.dot(w_ref[...], col_ref[...], preferred_element_type=jnp.float32)
        return jnp.maximum(out + b_ref[...], 0.0)    # bias + ReLU, (Cout, HW)

    y1 = conv3x3_relu(x8_ref[...], w1_ref, b1_ref)
    o1_ref[0] = y1.astype(o1_ref.dtype)
    y2 = conv3x3_relu(y1, w2_ref, b2_ref)
    o2_ref[0] = y2.astype(o2_ref.dtype)


def features_forward(x_nchw, mean, std, layers):
    N, C0, H, W = x_nchw.shape
    HW = H * W
    (w1, b1), (w2, b2) = layers
    C1, C2 = w1.shape[3], w2.shape[3]
    assert w1.shape[2] == C0 and w1.shape[2] <= _CP
    assert w2.shape[2] == C1 == _CP and C2 == _CP

    # NCHW -> (N, C, H*W) is a pure row-major reshape (no data movement); the
    # H*W axis becomes the lane / matmul-N axis.
    x = x_nchw.reshape(N, C0, HW)
    mean2 = mean.reshape(C0, 1).astype(jnp.float32)
    istd2 = (1.0 / std).reshape(C0, 1).astype(jnp.float32)   # precomputed reciprocal
    masks = _halo_masks(H, W)
    w1p, b1p = _pack_conv_weights(w1, _CP), b1.reshape(C1, 1)
    w2p, b2p = _pack_conv_weights(w2, _CP), b2.reshape(C2, 1)

    kernel = functools.partial(_features_kernel, H=H, W=W)

    y1, y2 = pl.pallas_call(
        kernel,
        out_shape=(jax.ShapeDtypeStruct((N, C1, HW), x_nchw.dtype),
                   jax.ShapeDtypeStruct((N, C2, HW), x_nchw.dtype)),
        grid=(N,),
        in_specs=[
            pl.BlockSpec((1, C0, HW), lambda n: (n, 0, 0)),
            pl.BlockSpec((C0, 1), lambda n: (0, 0)),
            pl.BlockSpec((C0, 1), lambda n: (0, 0)),
            pl.BlockSpec((9, HW), lambda n: (0, 0)),
            pl.BlockSpec((C1, 9 * _CP), lambda n: (0, 0)),
            pl.BlockSpec((C1, 1), lambda n: (0, 0)),
            pl.BlockSpec((C2, 9 * _CP), lambda n: (0, 0)),
            pl.BlockSpec((C2, 1), lambda n: (0, 0)),
        ],
        out_specs=(
            pl.BlockSpec((1, C1, HW), lambda n: (n, 0, 0)),
            pl.BlockSpec((1, C2, HW), lambda n: (n, 0, 0)),
        ),
        scratch_shapes=[
            pltpu.VMEM((_CP, HW), jnp.float32),        # widened normalized input
            pltpu.VMEM((9 * _CP, HW), jnp.float32),    # im2col buffer
        ],
        compiler_params=pltpu.CompilerParams(dimension_semantics=("parallel",)),
    )(x, mean2, istd2, masks, w1p, b1p, w2p, b2p)

    # (N, C, H*W) -> NCHW: free reshape (no transpose).
    return [y1.reshape(N, C1, H, W), y2.reshape(N, C2, H, W)]


class FeaturesPallas:
    def __init__(self, key):
        self.mean = jnp.array([0.485, 0.456, 0.406], jnp.float32)
        self.std = jnp.array([0.229, 0.224, 0.225], jnp.float32)
        # Deterministic synthetic layer stack: Conv(3->8)+ReLU, Conv(8->8)+ReLU
        k1, k2, k3, k4 = jax.random.split(key, 4)
        w1 = 0.1 * jax.random.normal(k1, (3, 3, 3, 8), jnp.float32)   # HWIO
        b1 = 0.01 * jax.random.normal(k2, (8,), jnp.float32)
        w2 = 0.1 * jax.random.normal(k3, (3, 3, 8, 8), jnp.float32)
        b2 = 0.01 * jax.random.normal(k4, (8,), jnp.float32)
        self.layers = [(w1, b1), (w2, b2)]

    def forward(self, x_nchw):
        # NCHW in, list of NCHW feature maps out (like the PyTorch module).
        return features_forward(x_nchw, self.mean, self.std, self.layers)

    # Plain-JAX reference for validation.
    def forward_ref(self, x_nchw):
        x = (x_nchw - self.mean[None, :, None, None]) / self.std[None, :, None, None]
        ys = []
        for (w_hwio, b) in self.layers:
            x = lax.conv_general_dilated(
                x, w_hwio, window_strides=(1, 1), padding="SAME",
                dimension_numbers=("NCHW", "HWIO", "NCHW"))
            x = jax.nn.relu(x + b[None, :, None, None])
            ys.append(x)
        return ys


if __name__ == "__main__":
    key = jax.random.PRNGKey(0)
    k_x, k_p = jax.random.split(key)
    # batch=2, channels=3 (fixed by ImageNet mean/std), spatial=16
    x = jax.random.uniform(k_x, (2, 3, 16, 16), jnp.float32)

    model = FeaturesPallas(k_p)
    outs = model.forward(x)
    outs = [jax.block_until_ready(o) for o in outs]

    refs = model.forward_ref(x)
    for o, r in zip(outs, refs):
        assert o.shape == r.shape, (o.shape, r.shape)
        np.testing.assert_allclose(np.asarray(o), np.asarray(r),
                                   rtol=1e-4, atol=1e-4)

    print("KERNEL_OK")
</pallas_src>

<mosaic_0001>
module attributes {stable_mosaic.version = 11 : i64} {
  func.func @_features_kernel(%arg0: i32, %arg1: memref<1x3x256xf32, #tpu.memory_space<vmem>>, %arg2: memref<3x1xf32, #tpu.memory_space<vmem>>, %arg3: memref<3x1xf32, #tpu.memory_space<vmem>>, %arg4: memref<9x256xf32, #tpu.memory_space<vmem>>, %arg5: memref<8x72xf32, #tpu.memory_space<vmem>>, %arg6: memref<8x1xf32, #tpu.memory_space<vmem>>, %arg7: memref<8x72xf32, #tpu.memory_space<vmem>>, %arg8: memref<8x1xf32, #tpu.memory_space<vmem>>, %arg9: memref<1x8x256xf32, #tpu.memory_space<vmem>>, %arg10: memref<1x8x256xf32, #tpu.memory_space<vmem>>, %arg11: memref<8x256xf32, #tpu.memory_space<vmem>>, %arg12: memref<72x256xf32, #tpu.memory_space<vmem>>) attributes {dimension_semantics = [#tpu.dimension_semantics<parallel>], iteration_bounds = array<i64: 2>, scalar_prefetch = 0 : i64, scratch_operands = 2 : i64, tpu.core_type = #tpu.core_type<tc>, window_params = [{transform_indices = @transform_0, window_bounds = array<i64: 1, 3, 256>}, {pipeline_mode = #tpu.pipeline_mode<synchronous>, transform_indices = @transform_1, window_bounds = array<i64: 3, 1>}, {pipeline_mode = #tpu.pipeline_mode<synchronous>, transform_indices = @transform_2, window_bounds = array<i64: 3, 1>}, {pipeline_mode = #tpu.pipeline_mode<synchronous>, transform_indices = @transform_3, window_bounds = array<i64: 9, 256>}, {pipeline_mode = #tpu.pipeline_mode<synchronous>, transform_indices = @transform_4, window_bounds = array<i64: 8, 72>}, {pipeline_mode = #tpu.pipeline_mode<synchronous>, transform_indices = @transform_5, window_bounds = array<i64: 8, 1>}, {pipeline_mode = #tpu.pipeline_mode<synchronous>, transform_indices = @transform_6, window_bounds = array<i64: 8, 72>}, {pipeline_mode = #tpu.pipeline_mode<synchronous>, transform_indices = @transform_7, window_bounds = array<i64: 8, 1>}, {transform_indices = @transform_8, window_bounds = array<i64: 1, 8, 256>}, {transform_indices = @transform_9, window_bounds = array<i64: 1, 8, 256>}]} {
    %cst = arith.constant 0.000000e+00 : f32
    %0 = vector.broadcast %cst : f32 to vector<8x256xf32>
    %c0 = arith.constant 0 : index
    %c0_0 = arith.constant 0 : index
    %1 = vector.load %arg11[%c0, %c0_0] : memref<8x256xf32, #tpu.memory_space<vmem>>, vector<8x256xf32>
    tpu.vector_store %arg11[%c0, %c0_0], %0 {strides = array<i32>} : memref<8x256xf32, #tpu.memory_space<vmem>>, vector<8x256xf32>,
    %c0_1 = arith.constant 0 : index
    %c0_2 = arith.constant 0 : index
    %c0_3 = arith.constant 0 : index
    %2 = vector.load %arg1[%c0_1, %c0_2, %c0_3] : memref<1x3x256xf32, #tpu.memory_space<vmem>>, vector<1x3x256xf32>
    %3 = vector.shape_cast %2 : vector<1x3x256xf32> to vector<3x256xf32>
    %c0_4 = arith.constant 0 : index
    %c0_5 = arith.constant 0 : index
    %4 = vector.load %arg2[%c0_4, %c0_5] : memref<3x1xf32, #tpu.memory_space<vmem>>, vector<3x1xf32>
    %5 = vector.broadcast %4 : vector<3x1xf32> to vector<3x256xf32>
    %6 = arith.subf %3, %5 : vector<3x256xf32>
    %c0_6 = arith.constant 0 : index
    %c0_7 = arith.constant 0 : index
    %7 = vector.load %arg3[%c0_6, %c0_7] : memref<3x1xf32, #tpu.memory_space<vmem>>, vector<3x1xf32>
    %8 = vector.broadcast %7 : vector<3x1xf32> to vector<3x256xf32>
    %9 = arith.mulf %6, %8 : vector<3x256xf32>
    %c0_8 = arith.constant 0 : index
    %c0_9 = arith.constant 0 : index
    %10 = vector.load %arg11[%c0_8, %c0_9] : memref<8x256xf32, #tpu.memory_space<vmem>>, vector<3x256xf32>
    tpu.vector_store %arg11[%c0_8, %c0_9], %9 {strides = array<i32>} : memref<8x256xf32, #tpu.memory_space<vmem>>, vector<3x256xf32>,
    %c0_10 = arith.constant 0 : index
    %c0_11 = arith.constant 0 : index
    %11 = vector.load %arg11[%c0_10, %c0_11] : memref<8x256xf32, #tpu.memory_space<vmem>>, vector<8x256xf32>
    %c17_i32 = arith.constant 17 : i32
    %12 = tpu.dynamic_rotate %11 by %c17_i32 dim 1 : vector<8x256xf32>, i32 -> vector<8x256xf32>
    %c0_12 = arith.constant 0 : index
    %c0_13 = arith.constant 0 : index
    %13 = vector.load %arg4[%c0_12, %c0_13] : memref<9x256xf32, #tpu.memory_space<vmem>>, vector<1x256xf32>
    %14 = vector.broadcast %13 : vector<1x256xf32> to vector<8x256xf32>
    %15 = arith.mulf %12, %14 : vector<8x256xf32>
    %c0_14 = arith.constant 0 : index
    %c0_15 = arith.constant 0 : index
    %16 = vector.load %arg12[%c0_14, %c0_15] : memref<72x256xf32, #tpu.memory_space<vmem>>, vector<8x256xf32>
    tpu.vector_store %arg12[%c0_14, %c0_15], %15 {strides = array<i32>} : memref<72x256xf32, #tpu.memory_space<vmem>>, vector<8x256xf32>,
    %c16_i32 = arith.constant 16 : i32
    %17 = tpu.dynamic_rotate %11 by %c16_i32 dim 1 : vector<8x256xf32>, i32 -> vector<8x256xf32>
    %c1 = arith.constant 1 : index
    %c0_16 = arith.constant 0 : index
    %18 = vector.load %arg4[%c1, %c0_16] : memref<9x256xf32, #tpu.memory_space<vmem>>, vector<1x256xf32>
    %19 = vector.broadcast %18 : vector<1x256xf32> to vector<8x256xf32>
    %20 = arith.mulf %17, %19 : vector<8x256xf32>
    %c8 = arith.constant 8 : index
    %c0_17 = arith.constant 0 : index
    %21 = vector.load %arg12[%c8, %c0_17] : memref<72x256xf32, #tpu.memory_space<vmem>>, vector<8x256xf32>
    tpu.vector_store %arg12[%c8, %c0_17], %20 {strides = array<i32>} : memref<72x256xf32, #tpu.memory_space<vmem>>, vector<8x256xf32>,
    %c15_i32 = arith.constant 15 : i32
    %22 = tpu.dynamic_rotate %11 by %c15_i32 dim 1 : vector<8x256xf32>, i32 -> vector<8x256xf32>
    %c2 = arith.constant 2 : index
    %c0_18 = arith.constant 0 : index
    %23 = vector.load %arg4[%c2, %c0_18] : memref<9x256xf32, #tpu.memory_space<vmem>>, vector<1x256xf32>
    %24 = vector.broadcast %23 : vector<1x256xf32> to vector<8x256xf32>
    %25 = arith.mulf %22, %24 : vector<8x256xf32>
    %c16 = arith.constant 16 : index
    %c0_19 = arith.constant 0 : index
    %26 = vector.load %arg12[%c16, %c0_19] : memref<72x256xf32, #tpu.memory_space<vmem>>, vector<8x256xf32>
    tpu.vector_store %arg12[%c16, %c0_19], %25 {strides = array<i32>} : memref<72x256xf32, #tpu.memory_space<vmem>>, vector<8x256xf32>,
    %c1_i32 = arith.constant 1 : i32
    %27 = tpu.dynamic_rotate %11 by %c1_i32 dim 1 : vector<8x256xf32>, i32 -> vector<8x256xf32>
    %c3 = arith.constant 3 : index
    %c0_20 = arith.constant 0 : index
    %28 = vector.load %arg4[%c3, %c0_20] : memref<9x256xf32, #tpu.memory_space<vmem>>, vector<1x256xf32>
    %29 = vector.broadcast %28 : vector<1x256xf32> to vector<8x256xf32>
    %30 = arith.mulf %27, %29 : vector<8x256xf32>
    %c24 = arith.constant 24 : index
    %c0_21 = arith.constant 0 : index
    %31 = vector.load %arg12[%c24, %c0_21] : memref<72x256xf32, #tpu.memory_space<vmem>>, vector<8x256xf32>
    tpu.vector_store %arg12[%c24, %c0_21], %30 {strides = array<i32>} : memref<72x256xf32, #tpu.memory_space<vmem>>, vector<8x256xf32>,
    %c4 = arith.constant 4 : index
    %c0_22 = arith.constant 0 : index
    %32 = vector.load %arg4[%c4, %c0_22] : memref<9x256xf32, #tpu.memory_space<vmem>>, vector<1x256xf32>
    %33 = vector.broadcast %32 : vector<1x256xf32> to vector<8x256xf32>
    %34 = arith.mulf %11, %33 : vector<8x256xf32>
    %c32 = arith.constant 32 : index
    %c0_23 = arith.constant 0 : index
    %35 = vector.load %arg12[%c32, %c0_23] : memref<72x256xf32, #tpu.memory_space<vmem>>, vector<8x256xf32>
    tpu.vector_store %arg12[%c32, %c0_23], %34 {strides = array<i32>} : memref<72x256xf32, #tpu.memory_space<vmem>>, vector<8x256xf32>,
    %c255_i32 = arith.constant 255 : i32
    %36 = tpu.dynamic_rotate %11 by %c255_i32 dim 1 : vector<8x256xf32>, i32 -> vector<8x256xf32>
    %c5 = arith.constant 5 : index
    %c0_24 = arith.constant 0 : index
    %37 = vector.load %arg4[%c5, %c0_24] : memref<9x256xf32, #tpu.memory_space<vmem>>, vector<1x256xf32>
    %38 = vector.broadcast %37 : vector<1x256xf32> to vector<8x256xf32>
    %39 = arith.mulf %36, %38 : vector<8x256xf32>
    %c40 = arith.constant 40 : index
    %c0_25 = arith.constant 0 : index
    %40 = vector.load %arg12[%c40, %c0_25] : memref<72x256xf32, #tpu.memory_space<vmem>>, vector<8x256xf32>
    tpu.vector_store %arg12[%c40, %c0_25], %39 {strides = array<i32>} : memref<72x256xf32, #tpu.memory_space<vmem>>, vector<8x256xf32>,
    %c241_i32 = arith.constant 241 : i32
    %41 = tpu.dynamic_rotate %11 by %c241_i32 dim 1 : vector<8x256xf32>, i32 -> vector<8x256xf32>
    %c6 = arith.constant 6 : index
    %c0_26 = arith.constant 0 : index
    %42 = vector.load %arg4[%c6, %c0_26] : memref<9x256xf32, #tpu.memory_space<vmem>>, vector<1x256xf32>
    %43 = vector.broadcast %42 : vector<1x256xf32> to vector<8x256xf32>
    %44 = arith.mulf %41, %43 : vector<8x256xf32>
    %c48 = arith.constant 48 : index
    %c0_27 = arith.constant 0 : index
    %45 = vector.load %arg12[%c48, %c0_27] : memref<72x256xf32, #tpu.memory_space<vmem>>, vector<8x256xf32>
    tpu.vector_store %arg12[%c48, %c0_27], %44 {strides = array<i32>} : memref<72x256xf32, #tpu.memory_space<vmem>>, vector<8x256xf32>,
    %c240_i32 = arith.constant 240 : i32
    %46 = tpu.dynamic_rotate %11 by %c240_i32 dim 1 : vector<8x256xf32>, i32 -> vector<8x256xf32>
    %c7 = arith.constant 7 : index
    %c0_28 = arith.constant 0 : index
    %47 = vector.load %arg4[%c7, %c0_28] : memref<9x256xf32, #tpu.memory_space<vmem>>, vector<1x256xf32>
    %48 = vector.broadcast %47 : vector<1x256xf32> to vector<8x256xf32>
    %49 = arith.mulf %46, %48 : vector<8x256xf32>
    %c56 = arith.constant 56 : index
    %c0_29 = arith.constant 0 : index
    %50 = vector.load %arg12[%c56, %c0_29] : memref<72x256xf32, #tpu.memory_space<vmem>>, vector<8x256xf32>
    tpu.vector_store %arg12[%c56, %c0_29], %49 {strides = array<i32>} : memref<72x256xf32, #tpu.memory_space<vmem>>, vector<8x256xf32>,
    %c239_i32 = arith.constant 239 : i32
    %51 = tpu.dynamic_rotate %11 by %c239_i32 dim 1 : vector<8x256xf32>, i32 -> vector<8x256xf32>
    %c8_30 = arith.constant 8 : index
    %c0_31 = arith.constant 0 : index
    %52 = vector.load %arg4[%c8_30, %c0_31] : memref<9x256xf32, #tpu.memory_space<vmem>>, vector<1x256xf32>
    %53 = vector.broadcast %52 : vector<1x256xf32> to vector<8x256xf32>
    %54 = arith.mulf %51, %53 : vector<8x256xf32>
    %c64 = arith.constant 64 : index
    %c0_32 = arith.constant 0 : index
    %55 = vector.load %arg12[%c64, %c0_32] : memref<72x256xf32, #tpu.memory_space<vmem>>, vector<8x256xf32>
    tpu.vector_store %arg12[%c64, %c0_32], %54 {strides = array<i32>} : memref<72x256xf32, #tpu.memory_space<vmem>>, vector<8x256xf32>,
    %c0_33 = arith.constant 0 : index
    %c0_34 = arith.constant 0 : index
    %56 = vector.load %arg5[%c0_33, %c0_34] : memref<8x72xf32, #tpu.memory_space<vmem>>, vector<8x72xf32>
    %c0_35 = arith.constant 0 : index
    %c0_36 = arith.constant 0 : index
    %57 = vector.load %arg12[%c0_35, %c0_36] : memref<72x256xf32, #tpu.memory_space<vmem>>, vector<72x256xf32>
    %cst_37 = arith.constant dense<0.000000e+00> : vector<8x256xf32>
    %58 = tpu.matmul %56, %57, %cst_37 {dimension_numbers = #tpu.dot_dimension_numbers<[1], [0], [0], [1], [0, 0, 1, 1], [], []>} : vector<8x72xf32>, vector<72x256xf32>, vector<8x256xf32> -> vector<8x256xf32>
    %c0_38 = arith.constant 0 : index
    %c0_39 = arith.constant 0 : index
    %59 = vector.load %arg6[%c0_38, %c0_39] : memref<8x1xf32, #tpu.memory_space<vmem>>, vector<8x1xf32>
    %60 = vector.broadcast %59 : vector<8x1xf32> to vector<8x256xf32>
    %61 = arith.addf %58, %60 : vector<8x256xf32>
    %cst_40 = arith.constant 0.000000e+00 : f32
    %62 = vector.broadcast %cst_40 : f32 to vector<8x256xf32>
    %63 = arith.maximumf %61, %62 : vector<8x256xf32>
    %c0_41 = arith.constant 0 : index
    %c0_42 = arith.constant 0 : index
    %c0_43 = arith.constant 0 : index
    %64 = vector.load %arg9[%c0_41, %c0_42, %c0_43] : memref<1x8x256xf32, #tpu.memory_space<vmem>>, vector<1x8x256xf32>
    %65 = vector.shape_cast %64 : vector<1x8x256xf32> to vector<8x256xf32>
    %66 = vector.shape_cast %63 : vector<8x256xf32> to vector<1x8x256xf32>
    tpu.vector_store %arg9[%c0_41, %c0_42, %c0_43], %66 {strides = array<i32>} : memref<1x8x256xf32, #tpu.memory_space<vmem>>, vector<1x8x256xf32>,
    %c17_i32_44 = arith.constant 17 : i32
    %67 = tpu.dynamic_rotate %63 by %c17_i32_44 dim 1 : vector<8x256xf32>, i32 -> vector<8x256xf32>
    %c0_45 = arith.constant 0 : index
    %c0_46 = arith.constant 0 : index
    %68 = vector.load %arg4[%c0_45, %c0_46] : memref<9x256xf32, #tpu.memory_space<vmem>>, vector<1x256xf32>
    %69 = vector.broadcast %68 : vector<1x256xf32> to vector<8x256xf32>
    %70 = arith.mulf %67, %69 : vector<8x256xf32>
    %c0_47 = arith.constant 0 : index
    %c0_48 = arith.constant 0 : index
    %71 = vector.load %arg12[%c0_47, %c0_48] : memref<72x256xf32, #tpu.memory_space<vmem>>, vector<8x256xf32>
    tpu.vector_store %arg12[%c0_47, %c0_48], %70 {strides = array<i32>} : memref<72x256xf32, #tpu.memory_space<vmem>>, vector<8x256xf32>,
    %c16_i32_49 = arith.constant 16 : i32
    %72 = tpu.dynamic_rotate %63 by %c16_i32_49 dim 1 : vector<8x256xf32>, i32 -> vector<8x256xf32>
    %c1_50 = arith.constant 1 : index
    %c0_51 = arith.constant 0 : index
    %73 = vector.load %arg4[%c1_50, %c0_51] : memref<9x256xf32, #tpu.memory_space<vmem>>, vector<1x256xf32>
    %74 = vector.broadcast %73 : vector<1x256xf32> to vector<8x256xf32>
    %75 = arith.mulf %72, %74 : vector<8x256xf32>
    %c8_52 = arith.constant 8 : index
    %c0_53 = arith.constant 0 : index
    %76 = vector.load %arg12[%c8_52, %c0_53] : memref<72x256xf32, #tpu.memory_space<vmem>>, vector<8x256xf32>
    tpu.vector_store %arg12[%c8_52, %c0_53], %75 {strides = array<i32>} : memref<72x256xf32, #tpu.memory_space<vmem>>, vector<8x256xf32>,
    %c15_i32_54 = arith.constant 15 : i32
    %77 = tpu.dynamic_rotate %63 by %c15_i32_54 dim 1 : vector<8x256xf32>, i32 -> vector<8x256xf32>
    %c2_55 = arith.constant 2 : index
    %c0_56 = arith.constant 0 : index
    %78 = vector.load %arg4[%c2_55, %c0_56] : memref<9x256xf32, #tpu.memory_space<vmem>>, vector<1x256xf32>
    %79 = vector.broadcast %78 : vector<1x256xf32> to vector<8x256xf32>
    %80 = arith.mulf %77, %79 : vector<8x256xf32>
    %c16_57 = arith.constant 16 : index
    %c0_58 = arith.constant 0 : index
    %81 = vector.load %arg12[%c16_57, %c0_58] : memref<72x256xf32, #tpu.memory_space<vmem>>, vector<8x256xf32>
    tpu.vector_store %arg12[%c16_57, %c0_58], %80 {strides = array<i32>} : memref<72x256xf32, #tpu.memory_space<vmem>>, vector<8x256xf32>,
    %c1_i32_59 = arith.constant 1 : i32
    %82 = tpu.dynamic_rotate %63 by %c1_i32_59 dim 1 : vector<8x256xf32>, i32 -> vector<8x256xf32>
    %c3_60 = arith.constant 3 : index
    %c0_61 = arith.constant 0 : index
    %83 = vector.load %arg4[%c3_60, %c0_61] : memref<9x256xf32, #tpu.memory_space<vmem>>, vector<1x256xf32>
    %84 = vector.broadcast %83 : vector<1x256xf32> to vector<8x256xf32>
    %85 = arith.mulf %82, %84 : vector<8x256xf32>
    %c24_62 = arith.constant 24 : index
    %c0_63 = arith.constant 0 : index
    %86 = vector.load %arg12[%c24_62, %c0_63] : memref<72x256xf32, #tpu.memory_space<vmem>>, vector<8x256xf32>
    tpu.vector_store %arg12[%c24_62, %c0_63], %85 {strides = array<i32>} : memref<72x256xf32, #tpu.memory_space<vmem>>, vector<8x256xf32>,
    %c4_64 = arith.constant 4 : index
    %c0_65 = arith.constant 0 : index
    %87 = vector.load %arg4[%c4_64, %c0_65] : memref<9x256xf32, #tpu.memory_space<vmem>>, vector<1x256xf32>
    %88 = vector.broadcast %87 : vector<1x256xf32> to vector<8x256xf32>
    %89 = arith.mulf %63, %88 : vector<8x256xf32>
    %c32_66 = arith.constant 32 : index
    %c0_67 = arith.constant 0 : index
    %90 = vector.load %arg12[%c32_66, %c0_67] : memref<72x256xf32, #tpu.memory_space<vmem>>, vector<8x256xf32>
    tpu.vector_store %arg12[%c32_66, %c0_67], %89 {strides = array<i32>} : memref<72x256xf32, #tpu.memory_space<vmem>>, vector<8x256xf32>,
    %c255_i32_68 = arith.constant 255 : i32
    %91 = tpu.dynamic_rotate %63 by %c255_i32_68 dim 1 : vector<8x256xf32>, i32 -> vector<8x256xf32>
    %c5_69 = arith.constant 5 : index
    %c0_70 = arith.constant 0 : index
    %92 = vector.load %arg4[%c5_69, %c0_70] : memref<9x256xf32, #tpu.memory_space<vmem>>, vector<1x256xf32>
    %93 = vector.broadcast %92 : vector<1x256xf32> to vector<8x256xf32>
    %94 = arith.mulf %91, %93 : vector<8x256xf32>
    %c40_71 = arith.constant 40 : index
    %c0_72 = arith.constant 0 : index
    %95 = vector.load %arg12[%c40_71, %c0_72] : memref<72x256xf32, #tpu.memory_space<vmem>>, vector<8x256xf32>
    tpu.vector_store %arg12[%c40_71, %c0_72], %94 {strides = array<i32>} : memref<72x256xf32, #tpu.memory_space<vmem>>, vector<8x256xf32>,
    %c241_i32_73 = arith.constant 241 : i32
    %96 = tpu.dynamic_rotate %63 by %c241_i32_73 dim 1 : vector<8x256xf32>, i32 -> vector<8x256xf32>
    %c6_74 = arith.constant 6 : index
    %c0_75 = arith.constant 0 : index
    %97 = vector.load %arg4[%c6_74, %c0_75] : memref<9x256xf32, #tpu.memory_space<vmem>>, vector<1x256xf32>
    %98 = vector.broadcast %97 : vector<1x256xf32> to vector<8x256xf32>
    %99 = arith.mulf %96, %98 : vector<8x256xf32>
    %c48_76 = arith.constant 48 : index
    %c0_77 = arith.constant 0 : index
    %100 = vector.load %arg12[%c48_76, %c0_77] : memref<72x256xf32, #tpu.memory_space<vmem>>, vector<8x256xf32>
    tpu.vector_store %arg12[%c48_76, %c0_77], %99 {strides = array<i32>} : memref<72x256xf32, #tpu.memory_space<vmem>>, vector<8x256xf32>,
    %c240_i32_78 = arith.constant 240 : i32
    %101 = tpu.dynamic_rotate %63 by %c240_i32_78 dim 1 : vector<8x256xf32>, i32 -> vector<8x256xf32>
    %c7_79 = arith.constant 7 : index
    %c0_80 = arith.constant 0 : index
    %102 = vector.load %arg4[%c7_79, %c0_80] : memref<9x256xf32, #tpu.memory_space<vmem>>, vector<1x256xf32>
    %103 = vector.broadcast %102 : vector<1x256xf32> to vector<8x256xf32>
    %104 = arith.mulf %101, %103 : vector<8x256xf32>
    %c56_81 = arith.constant 56 : index
    %c0_82 = arith.constant 0 : index
    %105 = vector.load %arg12[%c56_81, %c0_82] : memref<72x256xf32, #tpu.memory_space<vmem>>, vector<8x256xf32>
    tpu.vector_store %arg12[%c56_81, %c0_82], %104 {strides = array<i32>} : memref<72x256xf32, #tpu.memory_space<vmem>>, vector<8x256xf32>,
    %c239_i32_83 = arith.constant 239 : i32
    %106 = tpu.dynamic_rotate %63 by %c239_i32_83 dim 1 : vector<8x256xf32>, i32 -> vector<8x256xf32>
    %c8_84 = arith.constant 8 : index
    %c0_85 = arith.constant 0 : index
    %107 = vector.load %arg4[%c8_84, %c0_85] : memref<9x256xf32, #tpu.memory_space<vmem>>, vector<1x256xf32>
    %108 = vector.broadcast %107 : vector<1x256xf32> to vector<8x256xf32>
    %109 = arith.mulf %106, %108 : vector<8x256xf32>
    %c64_86 = arith.constant 64 : index
    %c0_87 = arith.constant 0 : index
    %110 = vector.load %arg12[%c64_86, %c0_87] : memref<72x256xf32, #tpu.memory_space<vmem>>, vector<8x256xf32>
    tpu.vector_store %arg12[%c64_86, %c0_87], %109 {strides = array<i32>} : memref<72x256xf32, #tpu.memory_space<vmem>>, vector<8x256xf32>,
    %c0_88 = arith.constant 0 : index
    %c0_89 = arith.constant 0 : index
    %111 = vector.load %arg7[%c0_88, %c0_89] : memref<8x72xf32, #tpu.memory_space<vmem>>, vector<8x72xf32>
    %c0_90 = arith.constant 0 : index
    %c0_91 = arith.constant 0 : index
    %112 = vector.load %arg12[%c0_90, %c0_91] : memref<72x256xf32, #tpu.memory_space<vmem>>, vector<72x256xf32>
    %cst_92 = arith.constant dense<0.000000e+00> : vector<8x256xf32>
    %113 = tpu.matmul %111, %112, %cst_92 {dimension_numbers = #tpu.dot_dimension_numbers<[1], [0], [0], [1], [0, 0, 1, 1], [], []>} : vector<8x72xf32>, vector<72x256xf32>, vector<8x256xf32> -> vector<8x256xf32>
    %c0_93 = arith.constant 0 : index
    %c0_94 = arith.constant 0 : index
    %114 = vector.load %arg8[%c0_93, %c0_94] : memref<8x1xf32, #tpu.memory_space<vmem>>, vector<8x1xf32>
    %115 = vector.broadcast %114 : vector<8x1xf32> to vector<8x256xf32>
    %116 = arith.addf %113, %115 : vector<8x256xf32>
    %cst_95 = arith.constant 0.000000e+00 : f32
    %117 = vector.broadcast %cst_95 : f32 to vector<8x256xf32>
    %118 = arith.maximumf %116, %117 : vector<8x256xf32>
    %c0_96 = arith.constant 0 : index
    %c0_97 = arith.constant 0 : index
    %c0_98 = arith.constant 0 : index
    %119 = vector.load %arg10[%c0_96, %c0_97, %c0_98] : memref<1x8x256xf32, #tpu.memory_space<vmem>>, vector<1x8x256xf32>
    %120 = vector.shape_cast %119 : vector<1x8x256xf32> to vector<8x256xf32>
    %121 = vector.shape_cast %118 : vector<8x256xf32> to vector<1x8x256xf32>
    tpu.vector_store %arg10[%c0_96, %c0_97, %c0_98], %121 {strides = array<i32>} : memref<1x8x256xf32, #tpu.memory_space<vmem>>, vector<1x8x256xf32>,
    return
  }
  func.func @transform_0(%arg0: i32) -> (i32, i32, i32) {
    %c0_i32 = arith.constant 0 : i32
    %c0_i32_0 = arith.constant 0 : i32
    %c0_i32_1 = arith.constant 0 : i32
    return %arg0, %c0_i32, %c0_i32_0 : i32, i32, i32
  }
  func.func @transform_1(%arg0: i32) -> (i32, i32) {
    %c0_i32 = arith.constant 0 : i32
    %c0_i32_0 = arith.constant 0 : i32
    %c0_i32_1 = arith.constant 0 : i32
    return %c0_i32, %c0_i32_0 : i32, i32
  }
  func.func @transform_2(%arg0: i32) -> (i32, i32) {
    %c0_i32 = arith.constant 0 : i32
    %c0_i32_0 = arith.constant 0 : i32
    %c0_i32_1 = arith.constant 0 : i32
    return %c0_i32, %c0_i32_0 : i32, i32
  }
  func.func @transform_3(%arg0: i32) -> (i32, i32) {
    %c0_i32 = arith.constant 0 : i32
    %c0_i32_0 = arith.constant 0 : i32
    %c0_i32_1 = arith.constant 0 : i32
    return %c0_i32, %c0_i32_0 : i32, i32
  }
  func.func @transform_4(%arg0: i32) -> (i32, i32) {
    %c0_i32 = arith.constant 0 : i32
    %c0_i32_0 = arith.constant 0 : i32
    %c0_i32_1 = arith.constant 0 : i32
    return %c0_i32, %c0_i32_0 : i32, i32
  }
  func.func @transform_5(%arg0: i32) -> (i32, i32) {
    %c0_i32 = arith.constant 0 : i32
    %c0_i32_0 = arith.constant 0 : i32
    %c0_i32_1 = arith.constant 0 : i32
    return %c0_i32, %c0_i32_0 : i32, i32
  }
  func.func @transform_6(%arg0: i32) -> (i32, i32) {
    %c0_i32 = arith.constant 0 : i32
    %c0_i32_0 = arith.constant 0 : i32
    %c0_i32_1 = arith.constant 0 : i32
    return %c0_i32, %c0_i32_0 : i32, i32
  }
  func.func @transform_7(%arg0: i32) -> (i32, i32) {
    %c0_i32 = arith.constant 0 : i32
    %c0_i32_0 = arith.constant 0 : i32
    %c0_i32_1 = arith.constant 0 : i32
    return %c0_i32, %c0_i32_0 : i32, i32
  }
  func.func @transform_8(%arg0: i32) -> (i32, i32, i32) {
    %c0_i32 = arith.constant 0 : i32
    %c0_i32_0 = arith.constant 0 : i32
    %c0_i32_1 = arith.constant 0 : i32
    return %arg0, %c0_i32, %c0_i32_0 : i32, i32, i32
  }
  func.func @transform_9(%arg0: i32) -> (i32, i32, i32) {
    %c0_i32 = arith.constant 0 : i32
    %c0_i32_0 = arith.constant 0 : i32
    %c0_i32_1 = arith.constant 0 : i32
    return %arg0, %c0_i32, %c0_i32_0 : i32, i32, i32
  }
}

</mosaic_0001>

<llo_original>
// kernel: tpu_custom_call.1
$region0: #{tpu_custom_call.1}
  #allocation0 [shape = 'u32[]', space=smem, size = 0x4, offset = 0x4, fixed_abs, tag = 'smem constant byte address 0x4 - core index']
  #allocation1 [shape = 'u32[144,128]{1,0:T(1,128)}', space=vmem, size = 0x12000, scoped, tag = 'internal scratch']
  #allocation2 [shape = 'f32[8,256]{1,0:T(8,128)}', space=vmem, size = 0x2000, scoped, tag = 'scratch operand']
  #allocation3 [shape = 'f32[72,256]{1,0:T(8,128)}', space=vmem, size = 0x12000, scoped, tag = 'scratch operand']
  %s0 = inlined_call_operand.vmem [shape: f32[2,3,256], index: 0, kind: input, shape index: {}]
  %s1 = inlined_call_operand.vmem [shape: f32[3,1], index: 1, kind: input, shape index: {}]
  %s2 = inlined_call_operand.vmem [shape: f32[3,1], index: 2, kind: input, shape index: {}]
  %s3 = inlined_call_operand.vmem [shape: f32[9,256], index: 3, kind: input, shape index: {}]
  %s4 = inlined_call_operand.vmem [shape: f32[8,72], index: 4, kind: input, shape index: {}]
  %s5 = inlined_call_operand.vmem [shape: f32[8,1], index: 5, kind: input, shape index: {}]
  %s6 = inlined_call_operand.vmem [shape: f32[8,72], index: 6, kind: input, shape index: {}]
  %s7 = inlined_call_operand.vmem [shape: f32[8,1], index: 7, kind: input, shape index: {}]
  %s8 = inlined_call_operand.hbm [shape: f32[2,8,256], index: 8, kind: output, shape index: {0}]
  %s9 = inlined_call_operand.hbm [shape: f32[2,8,256], index: 9, kind: output, shape index: {1}]
  %10 = xla_tuple %s8, %s9
  %s11 = sld [smem:[#allocation0]]
  $region73: #{tpu_custom_call.1} parent=0
    _
  %s13 = ssub.s32 1, %s11
  %s14 = scalar_select 0, %s13, %s11
  $region1: #{tpu_custom_call.1} parent=0
    #allocation4 [shape = 'u8[16384]{0}', space=vmem, size = 0x4000, scoped, tag = 'output window, operand 0']
    #allocation5 [shape = 's32[2]{0}', space=sflag, size = 0x8, scoped, tag = 'scoped memory for tpu_custom_call.1']
    #allocation6 [shape = 'u8[16384]{0}', space=vmem, size = 0x4000, scoped, tag = 'output window, operand 1']
    #allocation7 [shape = 's32[2]{0}', space=sflag, size = 0x8, scoped, tag = 'scoped memory for tpu_custom_call.1']
    %15 = vsyncpa [#allocation5], 0
    %s16 = scalar_lea.sflag [#allocation5], 1
    %17 = vsyncpa %s16, 0
    %18 = vsyncpa [#allocation7], 0
    %s19 = scalar_lea.sflag [#allocation7], 1
    %20 = vsyncpa %s19, 0
    loop: start=0, step=1, limit=4
    $region2: #{tpu_custom_call.1} parent=1 // loop_pre_header
      _
    $region3: #{tpu_custom_call.1} parent=1 // loop_header
      %s22 = sphi 0, %s26
      %p23 = scmp.ge.s32.totalorder %s22, 4
      %s32 = sphi 0, %s34
      %s35 = sphi 0, %s32
      %s36 = sphi 0, %s35
      %s52 = sphi 0, %s36
      %s56 = sphi 0, %s56
      %s58 = sphi 0, %s56
      %s59 = sphi 0, %s58
      %s73 = sphi 0, %s59
      %s77 = sphi 0, %s77
      %s79 = sphi 0, %s77
      %s80 = sphi 0, %s79
      %s94 = sphi 0, %s80
      %s98 = sphi 0, %s98
      %s100 = sphi 0, %s98
      %s101 = sphi 0, %s100
      %s115 = sphi 0, %s101
      %s119 = sphi 0, %s119
      %s121 = sphi 0, %s119
      %s122 = sphi 0, %s121
      %s136 = sphi 0, %s122
      %s140 = sphi 0, %s140
      %s142 = sphi 0, %s140
      %s143 = sphi 0, %s142
      %s157 = sphi 0, %s143
      %s161 = sphi 0, %s161
      %s163 = sphi 0, %s161
      %s164 = sphi 0, %s163
      %s178 = sphi 0, %s164
      %s182 = sphi 0, %s182
      %s184 = sphi 0, %s182
      %s185 = sphi 0, %s184
      %s199 = sphi 0, %s185
      %s205 = sphi 0, %s207
      %s208 = sphi 0, %s205
      %s209 = sphi 0, %s208
      %s225 = sphi 0, %s209
      %s231 = sphi 0, %s233
      %s234 = sphi 0, %s231
      %s235 = sphi 0, %s234
      %s251 = sphi 0, %s235
    $region4: #{tpu_custom_call.1} parent=1 // loop_header_branch
      %25 = sbr.rel (%p23) target = $region8
    $region5: #{tpu_custom_call.1} parent=1 // loop_body
      %s27 = ssub.s32 %s22, 1
      %s28 = ssub.s32 %s22, 2
      %s29 = sadd.s32 %s22, 1
      %s30 = ssub.s32 %s22, %s29
      %p31 = scmp.eq.s32.totalorder %s30, 0
      %s33 = sadd.s32 %s32, 1
      %s34 = scalar_select %p31, %s32, %s33
      %p37 = pneg %p31
      %p38 = scmp.eq.s32.totalorder %s22, 1
      %p39 = por %p37, %p38
      %p40 = scmp.ne.s32.totalorder %s32, %s35
      %p41 = scmp.eq.s32.totalorder %s22, 0
      %p42 = por %p40, %p41
      %p43 = scmp.ne.s32.totalorder %s32, %s35
      %p44 = scmp.eq.s32.totalorder %s27, 1
      %p45 = por %p43, %p44
      %p46 = scmp.ne.s32.totalorder %s35, %s36
      %p47 = scmp.eq.s32.totalorder %s27, 0
      %p48 = por %p46, %p47
      %p49 = scmp.ne.s32.totalorder %s35, %s36
      %p50 = scmp.eq.s32.totalorder %s28, 1
      %p51 = por %p49, %p50
      %p53 = scmp.ne.s32.totalorder %s36, %s52
      %p54 = scmp.eq.s32.totalorder %s28, 0
      %p55 = por %p53, %p54
      %s57 = sadd.s32 %s56, 1
      %p60 = scmp.eq.s32.totalorder %s22, 1
      %p61 = scmp.ne.s32.totalorder %s56, %s58
      %p62 = scmp.eq.s32.totalorder %s22, 0
      %p63 = por %p61, %p62
      %p64 = scmp.ne.s32.totalorder %s56, %s58
      %p65 = scmp.eq.s32.totalorder %s27, 1
      %p66 = por %p64, %p65
      %p67 = scmp.ne.s32.totalorder %s58, %s59
      %p68 = scmp.eq.s32.totalorder %s27, 0
      %p69 = por %p67, %p68
      %p70 = scmp.ne.s32.totalorder %s58, %s59
      %p71 = scmp.eq.s32.totalorder %s28, 1
      %p72 = por %p70, %p71
      %p74 = scmp.ne.s32.totalorder %s59, %s73
      %p75 = scmp.eq.s32.totalorder %s28, 0
      %p76 = por %p74, %p75
      %s78 = sadd.s32 %s77, 1
      %p81 = scmp.eq.s32.totalorder %s22, 1
      %p82 = scmp.ne.s32.totalorder %s77, %s79
      %p83 = scmp.eq.s32.totalorder %s22, 0
      %p84 = por %p82, %p83
      %p85 = scmp.ne.s32.totalorder %s77, %s79
      %p86 = scmp.eq.s32.totalorder %s27, 1
      %p87 = por %p85, %p86
      %p88 = scmp.ne.s32.totalorder %s79, %s80
      %p89 = scmp.eq.s32.totalorder %s27, 0
      %p90 = por %p88, %p89
      %p91 = scmp.ne.s32.totalorder %s79, %s80
      %p92 = scmp.eq.s32.totalorder %s28, 1
      %p93 = por %p91, %p92
      %p95 = scmp.ne.s32.totalorder %s80, %s94
      %p96 = scmp.eq.s32.totalorder %s28, 0
      %p97 = por %p95, %p96
      %s99 = sadd.s32 %s98, 1
      %p102 = scmp.eq.s32.totalorder %s22, 1
      %p103 = scmp.ne.s32.totalorder %s98, %s100
      %p104 = scmp.eq.s32.totalorder %s22, 0
      %p105 = por %p103, %p104
      %p106 = scmp.ne.s32.totalorder %s98, %s100
      %p107 = scmp.eq.s32.totalorder %s27, 1
      %p108 = por %p106, %p107
      %p109 = scmp.ne.s32.totalorder %s100, %s101
      %p110 = scmp.eq.s32.totalorder %s27, 0
      %p111 = por %p109, %p110
      %p112 = scmp.ne.s32.totalorder %s100, %s101
      %p113 = scmp.eq.s32.totalorder %s28, 1
      %p114 = por %p112, %p113
      %p116 = scmp.ne.s32.totalorder %s101, %s115
      %p117 = scmp.eq.s32.totalorder %s28, 0
      %p118 = por %p116, %p117
      %s120 = sadd.s32 %s119, 1
      %p123 = scmp.eq.s32.totalorder %s22, 1
      %p124 = scmp.ne.s32.totalorder %s119, %s121
      %p125 = scmp.eq.s32.totalorder %s22, 0
      %p126 = por %p124, %p125
      %p127 = scmp.ne.s32.totalorder %s119, %s121
      %p128 = scmp.eq.s32.totalorder %s27, 1
      %p129 = por %p127, %p128
      %p130 = scmp.ne.s32.totalorder %s121, %s122
      %p131 = scmp.eq.s32.totalorder %s27, 0
      %p132 = por %p130, %p131
      %p133 = scmp.ne.s32.totalorder %s121, %s122
      %p134 = scmp.eq.s32.totalorder %s28, 1
      %p135 = por %p133, %p134
      %p137 = scmp.ne.s32.totalorder %s122, %s136
      %p138 = scmp.eq.s32.totalorder %s28, 0
      %p139 = por %p137, %p138
      %s141 = sadd.s32 %s140, 1
      %p144 = scmp.eq.s32.totalorder %s22, 1
      %p145 = scmp.ne.s32.totalorder %s140, %s142
      %p146 = scmp.eq.s32.totalorder %s22, 0
      %p147 = por %p145, %p146
      %p148 = scmp.ne.s32.totalorder %s140, %s142
      %p149 = scmp.eq.s32.totalorder %s27, 1
      %p150 = por %p148, %p149
      %p151 = scmp.ne.s32.totalorder %s142, %s143
      %p152 = scmp.eq.s32.totalorder %s27, 0
      %p153 = por %p151, %p152
      %p154 = scmp.ne.s32.totalorder %s142, %s143
      %p155 = scmp.eq.s32.totalorder %s28, 1
      %p156 = por %p154, %p155
      %p158 = scmp.ne.s32.totalorder %s143, %s157
      %p159 = scmp.eq.s32.totalorder %s28, 0
      %p160 = por %p158, %p159
      %s162 = sadd.s32 %s161, 1
      %p165 = scmp.eq.s32.totalorder %s22, 1
      %p166 = scmp.ne.s32.totalorder %s161, %s163
      %p167 = scmp.eq.s32.totalorder %s22, 0
      %p168 = por %p166, %p167
      %p169 = scmp.ne.s32.totalorder %s161, %s163
      %p170 = scmp.eq.s32.totalorder %s27, 1
      %p171 = por %p169, %p170
      %p172 = scmp.ne.s32.totalorder %s163, %s164
      %p173 = scmp.eq.s32.totalorder %s27, 0
      %p174 = por %p172, %p173
      %p175 = scmp.ne.s32.totalorder %s163, %s164
      %p176 = scmp.eq.s32.totalorder %s28, 1
      %p177 = por %p175, %p176
      %p179 = scmp.ne.s32.totalorder %s164, %s178
      %p180 = scmp.eq.s32.totalorder %s28, 0
      %p181 = por %p179, %p180
      %s183 = sadd.s32 %s182, 1
      %p186 = scmp.eq.s32.totalorder %s22, 1
      %p187 = scmp.ne.s32.totalorder %s182, %s184
      %p188 = scmp.eq.s32.totalorder %s22, 0
      %p189 = por %p187, %p188
      %p190 = scmp.ne.s32.totalorder %s182, %s184
      %p191 = scmp.eq.s32.totalorder %s27, 1
      %p192 = por %p190, %p191
      %p193 = scmp.ne.s32.totalorder %s184, %s185
      %p194 = scmp.eq.s32.totalorder %s27, 0
      %p195 = por %p193, %p194
      %p196 = scmp.ne.s32.totalorder %s184, %s185
      %p197 = scmp.eq.s32.totalorder %s28, 1
      %p198 = por %p196, %p197
      %p200 = scmp.ne.s32.totalorder %s185, %s199
      %p201 = scmp.eq.s32.totalorder %s28, 0
      %p202 = por %p200, %p201
      %s203 = ssub.s32 %s22, %s29
      %p204 = scmp.eq.s32.totalorder %s203, 0
      %s206 = sadd.s32 %s205, 1
      %s207 = scalar_select %p204, %s205, %s206
      %p210 = pneg %p204
      %p211 = scmp.eq.s32.totalorder %s22, 1
      %p212 = por %p210, %p211
      %p213 = scmp.ne.s32.totalorder %s205, %s208
      %p214 = scmp.eq.s32.totalorder %s22, 0
      %p215 = por %p213, %p214
      %p216 = scmp.ne.s32.totalorder %s205, %s208
      %p217 = scmp.eq.s32.totalorder %s27, 1
      %p218 = por %p216, %p217
      %p219 = scmp.ne.s32.totalorder %s208, %s209
      %p220 = scmp.eq.s32.totalorder %s27, 0
      %p221 = por %p219, %p220
      %p222 = scmp.ne.s32.totalorder %s208, %s209
      %p223 = scmp.eq.s32.totalorder %s28, 1
      %p224 = por %p222, %p223
      %p226 = scmp.ne.s32.totalorder %s209, %s225
      %p227 = scmp.eq.s32.totalorder %s28, 0
      %p228 = por %p226, %p227
      %s229 = ssub.s32 %s22, %s29
      %p230 = scmp.eq.s32.totalorder %s229, 0
      %s232 = sadd.s32 %s231, 1
      %s233 = scalar_select %p230, %s231, %s232
      %p236 = pneg %p230
      %p237 = scmp.eq.s32.totalorder %s22, 1
      %p238 = por %p236, %p237
      %p239 = scmp.ne.s32.totalorder %s231, %s234
      %p240 = scmp.eq.s32.totalorder %s22, 0
      %p241 = por %p239, %p240
      %p242 = scmp.ne.s32.totalorder %s231, %s234
      %p243 = scmp.eq.s32.totalorder %s27, 1
      %p244 = por %p242, %p243
      %p245 = scmp.ne.s32.totalorder %s234, %s235
      %p246 = scmp.eq.s32.totalorder %s27, 0
      %p247 = por %p245, %p246
      %p248 = scmp.ne.s32.totalorder %s234, %s235
      %p249 = scmp.eq.s32.totalorder %s28, 1
      %p250 = por %p248, %p249
      %p252 = scmp.ne.s32.totalorder %s235, %s251
      %p253 = scmp.eq.s32.totalorder %s28, 0
      %p254 = por %p252, %p253
      %p255 = scmp.le.s32.totalorder 1, %s22
      %p256 = scmp.lt.s32.totalorder %s22, 3
      %p257 = pnand %p255, %p256
      %p258 = pneg %p257
      // Predicated region
      $region9: #{tpu_custom_call.1} parent=5 // pred_check
        _
      $region10: #{tpu_custom_call.1} parent=5 // pred_check_branch
        %260 = sbr.rel (%p257) target = $region12
      $region11: #{tpu_custom_call.1} parent=5 // pred_region
        %s261 = ssub.s32 %s22, 1
        // Predicated region
        $region13: #{tpu_custom_call.1} parent=11 // pred_check
          %p262 = pneg %p69
        $region14: #{tpu_custom_call.1} parent=11 // pred_check_branch
          %264 = sbr.rel (%p262) target = $region16
        $region15: #{tpu_custom_call.1} parent=11 // pred_region
          _
        $region16: #{tpu_custom_call.1} parent=11 // pred_fallthru
          _
        // Predicated region
        $region17: #{tpu_custom_call.1} parent=11 // pred_check
          %p265 = pneg %p90
        $region18: #{tpu_custom_call.1} parent=11 // pred_check_branch
          %267 = sbr.rel (%p265) target = $region20
        $region19: #{tpu_custom_call.1} parent=11 // pred_region
          _
        $region20: #{tpu_custom_call.1} parent=11 // pred_fallthru
          _
        // Predicated region
        $region21: #{tpu_custom_call.1} parent=11 // pred_check
          %p268 = pneg %p111
        $region22: #{tpu_custom_call.1} parent=11 // pred_check_branch
          %270 = sbr.rel (%p268) target = $region24
        $region23: #{tpu_custom_call.1} parent=11 // pred_region
          _
        $region24: #{tpu_custom_call.1} parent=11 // pred_fallthru
          _
        // Predicated region
        $region25: #{tpu_custom_call.1} parent=11 // pred_check
          %p271 = pneg %p132
        $region26: #{tpu_custom_call.1} parent=11 // pred_check_branch
          %273 = sbr.rel (%p271) target = $region28
        $region27: #{tpu_custom_call.1} parent=11 // pred_region
          _
        $region28: #{tpu_custom_call.1} parent=11 // pred_fallthru
          _
        // Predicated region
        $region29: #{tpu_custom_call.1} parent=11 // pred_check
          %p274 = pneg %p153
        $region30: #{tpu_custom_call.1} parent=11 // pred_check_branch
          %276 = sbr.rel (%p274) target = $region32
        $region31: #{tpu_custom_call.1} parent=11 // pred_region
          _
        $region32: #{tpu_custom_call.1} parent=11 // pred_fallthru
          _
        // Predicated region
        $region33: #{tpu_custom_call.1} parent=11 // pred_check
          %p277 = pneg %p174
        $region34: #{tpu_custom_call.1} parent=11 // pred_check_branch
          %279 = sbr.rel (%p277) target = $region36
        $region35: #{tpu_custom_call.1} parent=11 // pred_region
          _
        $region36: #{tpu_custom_call.1} parent=11 // pred_fallthru
          _
        // Predicated region
        $region37: #{tpu_custom_call.1} parent=11 // pred_check
          %p280 = pneg %p195
        $region38: #{tpu_custom_call.1} parent=11 // pred_check_branch
          %282 = sbr.rel (%p280) target = $region40
        $region39: #{tpu_custom_call.1} parent=11 // pred_region
          _
        $region40: #{tpu_custom_call.1} parent=11 // pred_fallthru
          _
      $region12: #{tpu_custom_call.1} parent=5 // pred_fallthru
        _
      %p283 = scmp.lt.s32.totalorder %s22, 2
      // Predicated region
      $region41: #{tpu_custom_call.1} parent=5 // pred_check
        %p284 = pneg %p283
      $region42: #{tpu_custom_call.1} parent=5 // pred_check_branch
        %286 = sbr.rel (%p284) target = $region44
      $region43: #{tpu_custom_call.1} parent=5 // pred_region
        // Predicated region
        $region45: #{tpu_custom_call.1} parent=43 // pred_check
          %p287 = pneg %p42
        $region46: #{tpu_custom_call.1} parent=43 // pred_check_branch
          %289 = sbr.rel (%p287) target = $region48
        $region47: #{tpu_custom_call.1} parent=43 // pred_region
          %p290 = scmp.lt.s32.totalorder %s22, 1
          %s291 = scalar_select %p290, %s22, 1
          %s292 = smul.addr %s291, 2
          %s293 = smul.addr %s292, 4
          %s294 = scalar_lea.vmem %s0, %s293
        $region48: #{tpu_custom_call.1} parent=43 // pred_fallthru
          _
      $region44: #{tpu_custom_call.1} parent=5 // pred_fallthru
        _
      %p295 = scmp.le.s32.totalorder 1, %s22
      %p296 = scmp.lt.s32.totalorder %s22, 3
      %p297 = pnand %p295, %p296
      %p298 = pneg %p297
      // Predicated region
      $region49: #{tpu_custom_call.1} parent=5 // pred_check
        _
      $region50: #{tpu_custom_call.1} parent=5 // pred_check_branch
        %300 = sbr.rel (%p297) target = $region52
      $region51: #{tpu_custom_call.1} parent=5 // pred_region
        %s301 = ssub.s32 %s22, 1
        %p302 = scmp.lt.s32.totalorder %s27, 1
        %s303 = scalar_select %p302, %s27, 1
        %s304 = smul.addr %s303, 2
        %s305 = smul.addr %s304, 4
        %s306 = scalar_lea.vmem %s0, %s305
        %p307 = pneg %p48
        %p308 = pneg %p45
        %p309 = pneg %p69
        %p310 = pneg %p66
        %p311 = pneg %p90
        %p312 = pneg %p87
        %p313 = pneg %p111
        %p314 = pneg %p108
        %p315 = pneg %p132
        %p316 = pneg %p129
        %p317 = pneg %p153
        %p318 = pneg %p150
        %p319 = pneg %p174
        %p320 = pneg %p171
        %p321 = pneg %p195
        %p322 = pneg %p192
        %p323 = pneg %p221
        %p324 = pneg %p218
        %s325 = sand.u32 %s208, 1
        %s326 = scalar_lea.sflag [#allocation5], %s325
        %s327 = sand.u32 %s208, 1
        %s328 = smul.addr %s327, 16
        %s329 = scalar_lea.vmem [#allocation4], %s328
        %p330 = pneg %p247
        %p331 = pneg %p244
        %s332 = sand.u32 %s234, 1
        %s333 = scalar_lea.sflag [#allocation7], %s332
        %s334 = sand.u32 %s234, 1
        %s335 = smul.addr %s334, 16
        %s336 = scalar_lea.vmem [#allocation6], %s335
        %p337 = scmp.lt.s32.totalorder %s27, 1
        %s338 = scalar_select %p337, %s27, 1
        %s339 = smul.addr %s338, 2
        %s340 = smul.addr %s339, 4
        %s341 = scalar_lea.vmem %s0, %s340
        %342 = vst [vmem:[#allocation2] sm:$0xff] 0.0
        %343 = vst [vmem:[#allocation2 + $0x8] sm:$0xff] 0.0
        %v344 = vld [vmem:[%s341] sm:$0x77]
        %v345 = vld [vmem:[%s1] sm:$0x7]
        %347 = vset.pattern.permute.xlu0 0
        %348 = vperm.xlu0 %347, %v345
        %v349 = vpop.permute.xlu0 %348
        %v351 = vunpack.c.l.s4 839922192
        %v352 = vunpack.c.0.s8 %v351
        %v353 = vlaneseq
        %v354 = vshrl.u32 %v353, 7
        %v355 = vsub.s32 %v352, %v354
        %v356 = vrot.slane %v349, %v355
        %v358 = vsub.f32 %v344, %v356
        %v359 = vld [vmem:[%s2] sm:$0x7]
        %361 = vset.pattern.permute.xlu0 0
        %362 = vperm.xlu0 %361, %v359
        %v363 = vpop.permute.xlu0 %362
        %v365 = vunpack.c.l.s4 839922192
        %v366 = vunpack.c.0.s8 %v365
        %v367 = vlaneseq
        %v368 = vshrl.u32 %v367, 7
        %v369 = vsub.s32 %v366, %v368
        %v370 = vrot.slane %v363, %v369
        %v372 = vmul.f32 %v358, %v370
        %v374 = vcombine.high %v372, %v372
        %376 = vst [vmem:[#allocation2] sm:$0x7] %v372
        %377 = vst [vmem:[#allocation2 + $0x8] sm:$0x7] %v374
        %v378 = vld [vmem:[#allocation2] sm:$0xff]
        %v379 = vld [vmem:[#allocation2 + $0x8] sm:$0xff]
        %380 = vrot.lane.b32.xlu0 %v378, 17
        %v381 = vpop.permute.xlu0 %380
        %382 = vrot.lane.b32.xlu0 %v379, 17
        %v383 = vpop.permute.xlu0 %382
        %v384 = vlaneseq
        %v385 = vand.u32 %v384, 127
        %vm386 = vcmp.lt.s32.totalorder %v385, 17
        %v387 = vsel %vm386, %v381, %v383
        %v388 = vsel %vm386, %v383, %v381
        %v389 = vld [vmem:[%s3] ss:$8 sm:$0x3]
        %v391 = vlaneseq
        %v392 = vshrl.u32 %v391, 7
        %v393 = vsub.s32 0, %v392
        %v394 = vrot.slane %v389, %v393
        %v395 = vlaneseq
        %v396 = vshrl.u32 %v395, 7
        %v397 = vsub.s32 1, %v396
        %v398 = vrot.slane %v389, %v397
        %v401 = vmul.f32 %v388, %v394
        %v402 = vmul.f32 %v387, %v398
        %403 = vst [vmem:[#allocation3] sm:$0xff] %v401
        %404 = vst [vmem:[#allocation3 + $0x8] sm:$0xff] %v402
        %405 = vrot.lane.b32.xlu0 %v378, 16
        %v406 = vpop.permute.xlu0 %405
        %407 = vrot.lane.b32.xlu0 %v379, 16
        %v408 = vpop.permute.xlu0 %407
        %vm409 = vcmp.lt.s32.totalorder %v385, 16
        %v410 = vsel %vm409, %v406, %v408
        %v411 = vsel %vm409, %v408, %v406
        %s412 = scalar_lea.vmem %s3, 1
        %v413 = vld [vmem:[%s412] ss:$8 sm:$0x3]
        %v415 = vlaneseq
        %v416 = vshrl.u32 %v415, 7
        %v417 = vsub.s32 0, %v416
        %v418 = vrot.slane %v413, %v417
        %v419 = vlaneseq
        %v420 = vshrl.u32 %v419, 7
        %v421 = vsub.s32 1, %v420
        %v422 = vrot.slane %v413, %v421
        %v425 = vmul.f32 %v411, %v418
        %v426 = vmul.f32 %v410, %v422
        %427 = vst [vmem:[#allocation3 + $0x10] sm:$0xff] %v425
        %428 = vst [vmem:[#allocation3 + $0x18] sm:$0xff] %v426
        %429 = vrot.lane.b32.xlu0 %v378, 15
        %v430 = vpop.permute.xlu0 %429
        %431 = vrot.lane.b32.xlu0 %v379, 15
        %v432 = vpop.permute.xlu0 %431
        %vm433 = vcmp.lt.s32.totalorder %v385, 15
        %v434 = vsel %vm433, %v430, %v432
        %v435 = vsel %vm433, %v432, %v430
        %s436 = scalar_lea.vmem %s3, 2
        %v437 = vld [vmem:[%s436] ss:$8 sm:$0x3]
        %v439 = vlaneseq
        %v440 = vshrl.u32 %v439, 7
        %v441 = vsub.s32 0, %v440
        %v442 = vrot.slane %v437, %v441
        %v443 = vlaneseq
        %v444 = vshrl.u32 %v443, 7
        %v445 = vsub.s32 1, %v444
        %v446 = vrot.slane %v437, %v445
        %v449 = vmul.f32 %v435, %v442
        %v450 = vmul.f32 %v434, %v446
        %451 = vst [vmem:[#allocation3 + $0x20] sm:$0xff] %v449
        %452 = vst [vmem:[#allocation3 + $0x28] sm:$0xff] %v450
        %453 = vrot.lane.b32.xlu0 %v378, 1
        %v454 = vpop.permute.xlu0 %453
        %455 = vrot.lane.b32.xlu0 %v379, 1
        %v456 = vpop.permute.xlu0 %455
        %vm457 = vcmp.lt.s32.totalorder %v385, 1
        %v458 = vsel %vm457, %v454, %v456
        %v459 = vsel %vm457, %v456, %v454
        %s460 = scalar_lea.vmem %s3, 3
        %v461 = vld [vmem:[%s460] ss:$8 sm:$0x3]
        %v463 = vlaneseq
        %v464 = vshrl.u32 %v463, 7
        %v465 = vsub.s32 0, %v464
        %v466 = vrot.slane %v461, %v465
        %v467 = vlaneseq
        %v468 = vshrl.u32 %v467, 7
        %v469 = vsub.s32 1, %v468
        %v470 = vrot.slane %v461, %v469
        %v473 = vmul.f32 %v459, %v466
        %v474 = vmul.f32 %v458, %v470
        %475 = vst [vmem:[#allocation3 + $0x30] sm:$0xff] %v473
        %476 = vst [vmem:[#allocation3 + $0x38] sm:$0xff] %v474
        %s477 = scalar_lea.vmem %s3, 4
        %v478 = vld [vmem:[%s477] ss:$8 sm:$0x3]
        %v480 = vlaneseq
        %v481 = vshrl.u32 %v480, 7
        %v482 = vsub.s32 0, %v481
        %v483 = vrot.slane %v478, %v482
        %v484 = vlaneseq
        %v485 = vshrl.u32 %v484, 7
        %v486 = vsub.s32 1, %v485
        %v487 = vrot.slane %v478, %v486
        %v490 = vmul.f32 %v378, %v483
        %v491 = vmul.f32 %v379, %v487
        %492 = vst [vmem:[#allocation3 + $0x40] sm:$0xff] %v490
        %493 = vst [vmem:[#allocation3 + $0x48] sm:$0xff] %v491
        %494 = vrot.lane.b32.xlu0 %v378, 127
        %v495 = vpop.permute.xlu0 %494
        %496 = vrot.lane.b32.xlu0 %v379, 127
        %v497 = vpop.permute.xlu0 %496
        %vm498 = vcmp.lt.s32.totalorder %v385, 127
        %v499 = vsel %vm498, %v495, %v497
        %v500 = vsel %vm498, %v497, %v495
        %s501 = scalar_lea.vmem %s3, 5
        %v502 = vld [vmem:[%s501] ss:$8 sm:$0x3]
        %v504 = vlaneseq
        %v505 = vshrl.u32 %v504, 7
        %v506 = vsub.s32 0, %v505
        %v507 = vrot.slane %v502, %v506
        %v508 = vlaneseq
        %v509 = vshrl.u32 %v508, 7
        %v510 = vsub.s32 1, %v509
        %v511 = vrot.slane %v502, %v510
        %v514 = vmul.f32 %v499, %v507
        %v515 = vmul.f32 %v500, %v511
        %516 = vst [vmem:[#allocation3 + $0x50] sm:$0xff] %v514
        %517 = vst [vmem:[#allocation3 + $0x58] sm:$0xff] %v515
        %518 = vrot.lane.b32.xlu0 %v378, 113
        %v519 = vpop.permute.xlu0 %518
        %520 = vrot.lane.b32.xlu0 %v379, 113
        %v521 = vpop.permute.xlu0 %520
        %vm522 = vcmp.lt.s32.totalorder %v385, 113
        %v523 = vsel %vm522, %v519, %v521
        %v524 = vsel %vm522, %v521, %v519
        %s525 = scalar_lea.vmem %s3, 6
        %v526 = vld [vmem:[%s525] ss:$8 sm:$0x3]
        %v528 = vlaneseq
        %v529 = vshrl.u32 %v528, 7
        %v530 = vsub.s32 0, %v529
        %v531 = vrot.slane %v526, %v530
        %v532 = vlaneseq
        %v533 = vshrl.u32 %v532, 7
        %v534 = vsub.s32 1, %v533
        %v535 = vrot.slane %v526, %v534
        %v538 = vmul.f32 %v523, %v531
        %v539 = vmul.f32 %v524, %v535
        %540 = vst [vmem:[#allocation3 + $0x60] sm:$0xff] %v538
        %541 = vst [vmem:[#allocation3 + $0x68] sm:$0xff] %v539
        %542 = vrot.lane.b32.xlu0 %v378, 112
        %v543 = vpop.permute.xlu0 %542
        %544 = vrot.lane.b32.xlu0 %v379, 112
        %v545 = vpop.permute.xlu0 %544
        %vm546 = vcmp.lt.s32.totalorder %v385, 112
        %v547 = vsel %vm546, %v543, %v545
        %v548 = vsel %vm546, %v545, %v543
        %s549 = scalar_lea.vmem %s3, 7
        %v550 = vld [vmem:[%s549] ss:$8 sm:$0x3]
        %v552 = vlaneseq
        %v553 = vshrl.u32 %v552, 7
        %v554 = vsub.s32 0, %v553
        %v555 = vrot.slane %v550, %v554
        %v556 = vlaneseq
        %v557 = vshrl.u32 %v556, 7
        %v558 = vsub.s32 1, %v557
        %v559 = vrot.slane %v550, %v558
        %v562 = vmul.f32 %v547, %v555
        %v563 = vmul.f32 %v548, %v559
        %564 = vst [vmem:[#allocation3 + $0x70] sm:$0xff] %v562
        %565 = vst [vmem:[#allocation3 + $0x78] sm:$0xff] %v563
        %566 = vrot.lane.b32.xlu0 %v378, 111
        %v567 = vpop.permute.xlu0 %566
        %568 = vrot.lane.b32.xlu0 %v379, 111
        %v569 = vpop.permute.xlu0 %568
        %vm570 = vcmp.lt.s32.totalorder %v385, 111
        %v571 = vsel %vm570, %v567, %v569
        %v572 = vsel %vm570, %v569, %v567
        %s573 = scalar_lea.vmem %s3, 16
        %v574 = vld [vmem:[%s573] ss:$8 sm:$0x3]
        %v576 = vlaneseq
        %v577 = vshrl.u32 %v576, 7
        %v578 = vsub.s32 0, %v577
        %v579 = vrot.slane %v574, %v578
        %v580 = vlaneseq
        %v581 = vshrl.u32 %v580, 7
        %v582 = vsub.s32 1, %v581
        %v583 = vrot.slane %v574, %v582
        %v586 = vmul.f32 %v571, %v579
        %v587 = vmul.f32 %v572, %v583
        %588 = vst [vmem:[#allocation3 + $0x80] sm:$0xff] %v586
        %589 = vst [vmem:[#allocation3 + $0x88] sm:$0xff] %v587
        %v590 = vld [vmem:[%s4] sm:$0xff]
        %v591 = vld [vmem:[#allocation3] sm:$0xff]
        %v592 = vld [vmem:[#allocation3 + $0x8] sm:$0xff]
        %v593 = vld [vmem:[#allocation3 + $0x10] sm:$0xff]
        %v594 = vld [vmem:[#allocation3 + $0x18] sm:$0xff]
        %v595 = vld [vmem:[#allocation3 + $0x20] sm:$0xff]
        %v596 = vld [vmem:[#allocation3 + $0x28] sm:$0xff]
        %v597 = vld [vmem:[#allocation3 + $0x30] sm:$0xff]
        %v598 = vld [vmem:[#allocation3 + $0x38] sm:$0xff]
        %v599 = vld [vmem:[#allocation3 + $0x40] sm:$0xff]
        %v600 = vld [vmem:[#allocation3 + $0x48] sm:$0xff]
        %v601 = vld [vmem:[#allocation3 + $0x50] sm:$0xff]
        %v602 = vld [vmem:[#allocation3 + $0x58] sm:$0xff]
        %v603 = vld [vmem:[#allocation3 + $0x60] sm:$0xff]
        %v604 = vld [vmem:[#allocation3 + $0x68] sm:$0xff]
        %v605 = vld [vmem:[#allocation3 + $0x70] sm:$0xff]
        %v606 = vld [vmem:[#allocation3 + $0x78] sm:$0xff]
        %v607 = vld [vmem:[#allocation3 + $0x80] sm:$0xff]
        %v608 = vld [vmem:[#allocation3 + $0x88] sm:$0xff]
        %v609 = vld [vmem:[%s5] sm:$0xff]
        %611 = vset.pattern.permute.xlu0 0
        %612 = vperm.xlu0 %611, %v609
        %v613 = vpop.permute.xlu0 %612
        %vm615 = vcmask 588800
        %v617 = vsel %vm615, %v590, 0
        %619 = vmatprep.subr.mxu0 %v592
        %620 = vmatpush1.msra.mxu0 %v591
        %621 = vmatprep.subr.mxu0 %v594
        %622 = vmatpush1.msra.mxu0 %v593
        %623 = vmatprep.subr.mxu0 %v596
        %624 = vmatpush1.msra.mxu0 %v595
        %625 = vmatprep.subr.mxu0 %v598
        %626 = vmatpush1.msra.mxu0 %v597
        %627 = vmatprep.subr.mxu0 %v600
        %628 = vmatpush1.msra.mxu0 %v599
        %629 = vmatprep.subr.mxu0 %v602
        %630 = vmatpush1.msra.mxu0 %v601
        %631 = vmatprep.subr.mxu0 %v604
        %632 = vmatpush1.msra.mxu0 %v603
        %633 = vmatprep.subr.mxu0 %v606
        %634 = vmatpush1.msra.mxu0 %v605
        %635 = vmatprep.subr.mxu0 %v608
        %636 = vmatpush1.msra.mxu0 %v607
        %637 = vmatprep.subr.mxu0 0.0
        %638 = vmatpush1.msra.mxu0 0.0
        %639 = vmatprep.subr.mxu0 0.0
        %640 = vmatpush1.msra.mxu0 0.0
        %641 = vmatprep.subr.mxu0 0.0
        %642 = vmatpush1.msra.mxu0 0.0
        %643 = vmatprep.subr.mxu0 0.0
        %644 = vmatpush1.msra.mxu0 0.0
        %645 = vmatprep.subr.mxu0 0.0
        %646 = vmatpush1.msra.mxu0 0.0
        %647 = vmatprep.subr.mxu0 0.0
        %648 = vmatpush1.msra.mxu0 0.0
        %649 = vmatprep.subr.mxu0 0.0
        %650 = vmatpush1.msra.mxu0 0.0
        %651 = vmatprep.subr.mxu0 0.0
        %652 = vmatpush1.msra.mxu0 0.0
        %653 = vmatprep.subr.mxu0 0.0
        %654 = vmatpush1.msra.mxu0 0.0
        %655 = vmatprep.subr.mxu0 0.0
        %656 = vmatpush1.msra.mxu0 0.0
        %657 = vmatprep.subr.mxu0 0.0
        %658 = vmatpush1.msra.mxu0 0.0
        %659 = vmatprep.subr.mxu0 0.0
        %660 = vmatpush1.msra.mxu0 0.0
        %661 = vmatprep.subr.mxu0 0.0
        %662 = vmatpush1.msra.mxu0 0.0
        %663 = vmatprep.subr.mxu0 0.0
        %664 = vmatpush1.msra.mxu0 0.0
        %665 = vmatprep.subr.mxu0 0.0
        %666 = vmatpush1.msra.mxu0 0.0
        %667 = vmatprep.subr.mxu0 0.0
        %668 = vmatpush1.msra.mxu0 0.0
        %669 = vmatprep.subr.mxu0 0.0
        %670 = vmatpush1.msra.mxu0 0.0
        %671 = vmatprep.subr.mxu0 0.0
        %672 = vmatpush1.msra.mxu0 0.0
        %673 = vmatprep.subr.mxu0 0.0
        %674 = vmatpush1.msra.mxu0 0.0
        %675 = vmatprep.subr.mxu0 0.0
        %676 = vmatpush1.msra.mxu0 0.0
        %677 = vmatprep.subr.mxu0 0.0
        %678 = vmatpush1.msra.mxu0 0.0
        %679 = vmatprep.subr.mxu0 0.0
        %680 = vmatpush1.msra.mxu0 0.0
        %681 = vmatprep.subr.mxu0 0.0
        %682 = vmatpush1.msra.mxu0 0.0
        %683 = vmatprep.mubr.f32.mxu0 0.0
        %684 = vmatmul.mubr.f32.gmra.mrb[0].mxu0 %v617
        %v685 = vpop.f32.mrb[0].mxu0
        %v686 = vadd.f32 %v613, %v685
        %v687 = vpop.f32.mrb[0].mxu0
        %v688 = vadd.f32 %v613, %v687
        %689 = vdwg.mxu0
        %v690 = vmax.f32 %v686, 0.0
        %v691 = vmax.f32 %v688, 0.0
        %692 = vst [vmem:[%s329] sm:$0xff] %v690
        %693 = vst [vmem:[%s329 + $0x8] sm:$0xff] %v691
        %694 = vrot.lane.b32.xlu0 %v690, 17
        %v695 = vpop.permute.xlu0 %694
        %696 = vrot.lane.b32.xlu0 %v691, 17
        %v697 = vpop.permute.xlu0 %696
        %v698 = vsel %vm386, %v695, %v697
        %v699 = vsel %vm386, %v697, %v695
        %v700 = vld [vmem:[%s3] ss:$8 sm:$0x3]
        %v702 = vlaneseq
        %v703 = vshrl.u32 %v702, 7
        %v704 = vsub.s32 0, %v703
        %v705 = vrot.slane %v700, %v704
        %v706 = vlaneseq
        %v707 = vshrl.u32 %v706, 7
        %v708 = vsub.s32 1, %v707
        %v709 = vrot.slane %v700, %v708
        %v712 = vmul.f32 %v699, %v705
        %v713 = vmul.f32 %v698, %v709
        %714 = vst [vmem:[#allocation3] sm:$0xff] %v712
        %715 = vst [vmem:[#allocation3 + $0x8] sm:$0xff] %v713
        %716 = vrot.lane.b32.xlu0 %v690, 16
        %v717 = vpop.permute.xlu0 %716
        %718 = vrot.lane.b32.xlu0 %v691, 16
        %v719 = vpop.permute.xlu0 %718
        %v720 = vsel %vm409, %v717, %v719
        %v721 = vsel %vm409, %v719, %v717
        %v722 = vld [vmem:[%s412] ss:$8 sm:$0x3]
        %v724 = vlaneseq
        %v725 = vshrl.u32 %v724, 7
        %v726 = vsub.s32 0, %v725
        %v727 = vrot.slane %v722, %v726
        %v728 = vlaneseq
        %v729 = vshrl.u32 %v728, 7
        %v730 = vsub.s32 1, %v729
        %v731 = vrot.slane %v722, %v730
        %v734 = vmul.f32 %v721, %v727
        %v735 = vmul.f32 %v720, %v731
        %736 = vst [vmem:[#allocation3 + $0x10] sm:$0xff] %v734
        %737 = vst [vmem:[#allocation3 + $0x18] sm:$0xff] %v735
        %738 = vrot.lane.b32.xlu0 %v690, 15
        %v739 = vpop.permute.xlu0 %738
        %740 = vrot.lane.b32.xlu0 %v691, 15
        %v741 = vpop.permute.xlu0 %740
        %v742 = vsel %vm433, %v739, %v741
        %v743 = vsel %vm433, %v741, %v739
        %v744 = vld [vmem:[%s436] ss:$8 sm:$0x3]
        %v746 = vlaneseq
        %v747 = vshrl.u32 %v746, 7
        %v748 = vsub.s32 0, %v747
        %v749 = vrot.slane %v744, %v748
        %v750 = vlaneseq
        %v751 = vshrl.u32 %v750, 7
        %v752 = vsub.s32 1, %v751
        %v753 = vrot.slane %v744, %v752
        %v756 = vmul.f32 %v743, %v749
        %v757 = vmul.f32 %v742, %v753
        %758 = vst [vmem:[#allocation3 + $0x20] sm:$0xff] %v756
        %759 = vst [vmem:[#allocation3 + $0x28] sm:$0xff] %v757
        %760 = vrot.lane.b32.xlu0 %v690, 1
        %v761 = vpop.permute.xlu0 %760
        %762 = vrot.lane.b32.xlu0 %v691, 1
        %v763 = vpop.permute.xlu0 %762
        %v764 = vsel %vm457, %v761, %v763
        %v765 = vsel %vm457, %v763, %v761
        %v766 = vld [vmem:[%s460] ss:$8 sm:$0x3]
        %v768 = vlaneseq
        %v769 = vshrl.u32 %v768, 7
        %v770 = vsub.s32 0, %v769
        %v771 = vrot.slane %v766, %v770
        %v772 = vlaneseq
        %v773 = vshrl.u32 %v772, 7
        %v774 = vsub.s32 1, %v773
        %v775 = vrot.slane %v766, %v774
        %v778 = vmul.f32 %v765, %v771
        %v779 = vmul.f32 %v764, %v775
        %780 = vst [vmem:[#allocation3 + $0x30] sm:$0xff] %v778
        %781 = vst [vmem:[#allocation3 + $0x38] sm:$0xff] %v779
        %v782 = vld [vmem:[%s477] ss:$8 sm:$0x3]
        %v784 = vlaneseq
        %v785 = vshrl.u32 %v784, 7
        %v786 = vsub.s32 0, %v785
        %v787 = vrot.slane %v782, %v786
        %v788 = vlaneseq
        %v789 = vshrl.u32 %v788, 7
        %v790 = vsub.s32 1, %v789
        %v791 = vrot.slane %v782, %v790
        %v794 = vmul.f32 %v690, %v787
        %v795 = vmul.f32 %v691, %v791
        %796 = vst [vmem:[#allocation3 + $0x40] sm:$0xff] %v794
        %797 = vst [vmem:[#allocation3 + $0x48] sm:$0xff] %v795
        %798 = vrot.lane.b32.xlu0 %v690, 127
        %v799 = vpop.permute.xlu0 %798
        %800 = vrot.lane.b32.xlu0 %v691, 127
        %v801 = vpop.permute.xlu0 %800
        %v802 = vsel %vm498, %v799, %v801
        %v803 = vsel %vm498, %v801, %v799
        %v804 = vld [vmem:[%s501] ss:$8 sm:$0x3]
        %v806 = vlaneseq
        %v807 = vshrl.u32 %v806, 7
        %v808 = vsub.s32 0, %v807
        %v809 = vrot.slane %v804, %v808
        %v810 = vlaneseq
        %v811 = vshrl.u32 %v810, 7
        %v812 = vsub.s32 1, %v811
        %v813 = vrot.slane %v804, %v812
        %v816 = vmul.f32 %v802, %v809
        %v817 = vmul.f32 %v803, %v813
        %818 = vst [vmem:[#allocation3 + $0x50] sm:$0xff] %v816
        %819 = vst [vmem:[#allocation3 + $0x58] sm:$0xff] %v817
        %820 = vrot.lane.b32.xlu0 %v690, 113
        %v821 = vpop.permute.xlu0 %820
        %822 = vrot.lane.b32.xlu0 %v691, 113
        %v823 = vpop.permute.xlu0 %822
        %v824 = vsel %vm522, %v821, %v823
        %v825 = vsel %vm522, %v823, %v821
        %v826 = vld [vmem:[%s525] ss:$8 sm:$0x3]
        %v828 = vlaneseq
        %v829 = vshrl.u32 %v828, 7
        %v830 = vsub.s32 0, %v829
        %v831 = vrot.slane %v826, %v830
        %v832 = vlaneseq
        %v833 = vshrl.u32 %v832, 7
        %v834 = vsub.s32 1, %v833
        %v835 = vrot.slane %v826, %v834
        %v838 = vmul.f32 %v824, %v831
        %v839 = vmul.f32 %v825, %v835
        %840 = vst [vmem:[#allocation3 + $0x60] sm:$0xff] %v838
        %841 = vst [vmem:[#allocation3 + $0x68] sm:$0xff] %v839
        %842 = vrot.lane.b32.xlu0 %v690, 112
        %v843 = vpop.permute.xlu0 %842
        %844 = vrot.lane.b32.xlu0 %v691, 112
        %v845 = vpop.permute.xlu0 %844
        %v846 = vsel %vm546, %v843, %v845
        %v847 = vsel %vm546, %v845, %v843
        %v848 = vld [vmem:[%s549] ss:$8 sm:$0x3]
        %v850 = vlaneseq
        %v851 = vshrl.u32 %v850, 7
        %v852 = vsub.s32 0, %v851
        %v853 = vrot.slane %v848, %v852
        %v854 = vlaneseq
        %v855 = vshrl.u32 %v854, 7
        %v856 = vsub.s32 1, %v855
        %v857 = vrot.slane %v848, %v856
        %v860 = vmul.f32 %v846, %v853
        %v861 = vmul.f32 %v847, %v857
        %862 = vst [vmem:[#allocation3 + $0x70] sm:$0xff] %v860
        %863 = vst [vmem:[#allocation3 + $0x78] sm:$0xff] %v861
        %864 = vrot.lane.b32.xlu0 %v690, 111
        %v865 = vpop.permute.xlu0 %864
        %866 = vrot.lane.b32.xlu0 %v691, 111
        %v867 = vpop.permute.xlu0 %866
        %v868 = vsel %vm570, %v865, %v867
        %v869 = vsel %vm570, %v867, %v865
        %v870 = vld [vmem:[%s573] ss:$8 sm:$0x3]
        %v872 = vlaneseq
        %v873 = vshrl.u32 %v872, 7
        %v874 = vsub.s32 0, %v873
        %v875 = vrot.slane %v870, %v874
        %v876 = vlaneseq
        %v877 = vshrl.u32 %v876, 7
        %v878 = vsub.s32 1, %v877
        %v879 = vrot.slane %v870, %v878
        %v882 = vmul.f32 %v868, %v875
        %v883 = vmul.f32 %v869, %v879
        %884 = vst [vmem:[#allocation3 + $0x80] sm:$0xff] %v882
        %885 = vst [vmem:[#allocation3 + $0x88] sm:$0xff] %v883
        %v886 = vld [vmem:[%s6] sm:$0xff]
        %v887 = vld [vmem:[#allocation3] sm:$0xff]
        %v888 = vld [vmem:[#allocation3 + $0x8] sm:$0xff]
        %v889 = vld [vmem:[#allocation3 + $0x10] sm:$0xff]
        %v890 = vld [vmem:[#allocation3 + $0x18] sm:$0xff]
        %v891 = vld [vmem:[#allocation3 + $0x20] sm:$0xff]
        %v892 = vld [vmem:[#allocation3 + $0x28] sm:$0xff]
        %v893 = vld [vmem:[#allocation3 + $0x30] sm:$0xff]
        %v894 = vld [vmem:[#allocation3 + $0x38] sm:$0xff]
        %v895 = vld [vmem:[#allocation3 + $0x40] sm:$0xff]
        %v896 = vld [vmem:[#allocation3 + $0x48] sm:$0xff]
        %v897 = vld [vmem:[#allocation3 + $0x50] sm:$0xff]
        %v898 = vld [vmem:[#allocation3 + $0x58] sm:$0xff]
        %v899 = vld [vmem:[#allocation3 + $0x60] sm:$0xff]
        %v900 = vld [vmem:[#allocation3 + $0x68] sm:$0xff]
        %v901 = vld [vmem:[#allocation3 + $0x70] sm:$0xff]
        %v902 = vld [vmem:[#allocation3 + $0x78] sm:$0xff]
        %v903 = vld [vmem:[#allocation3 + $0x80] sm:$0xff]
        %v904 = vld [vmem:[#allocation3 + $0x88] sm:$0xff]
        %v905 = vld [vmem:[%s7] sm:$0xff]
        %907 = vset.pattern.permute.xlu0 0
        %908 = vperm.xlu0 %907, %v905
        %v909 = vpop.permute.xlu0 %908
        %v912 = vsel %vm615, %v886, 0
        %914 = vmatprep.subr.mxu0 %v888
        %915 = vmatpush1.msra.mxu0 %v887
        %916 = vmatprep.subr.mxu0 %v890
        %917 = vmatpush1.msra.mxu0 %v889
        %918 = vmatprep.subr.mxu0 %v892
        %919 = vmatpush1.msra.mxu0 %v891
        %920 = vmatprep.subr.mxu0 %v894
        %921 = vmatpush1.msra.mxu0 %v893
        %922 = vmatprep.subr.mxu0 %v896
        %923 = vmatpush1.msra.mxu0 %v895
        %924 = vmatprep.subr.mxu0 %v898
        %925 = vmatpush1.msra.mxu0 %v897
        %926 = vmatprep.subr.mxu0 %v900
        %927 = vmatpush1.msra.mxu0 %v899
        %928 = vmatprep.subr.mxu0 %v902
        %929 = vmatpush1.msra.mxu0 %v901
        %930 = vmatprep.subr.mxu0 %v904
        %931 = vmatpush1.msra.mxu0 %v903
        %932 = vmatprep.subr.mxu0 0.0
        %933 = vmatpush1.msra.mxu0 0.0
        %934 = vmatprep.subr.mxu0 0.0
        %935 = vmatpush1.msra.mxu0 0.0
        %936 = vmatprep.subr.mxu0 0.0
        %937 = vmatpush1.msra.mxu0 0.0
        %938 = vmatprep.subr.mxu0 0.0
        %939 = vmatpush1.msra.mxu0 0.0
        %940 = vmatprep.subr.mxu0 0.0
        %941 = vmatpush1.msra.mxu0 0.0
        %942 = vmatprep.subr.mxu0 0.0
        %943 = vmatpush1.msra.mxu0 0.0
        %944 = vmatprep.subr.mxu0 0.0
        %945 = vmatpush1.msra.mxu0 0.0
        %946 = vmatprep.subr.mxu0 0.0
        %947 = vmatpush1.msra.mxu0 0.0
        %948 = vmatprep.subr.mxu0 0.0
        %949 = vmatpush1.msra.mxu0 0.0
        %950 = vmatprep.subr.mxu0 0.0
        %951 = vmatpush1.msra.mxu0 0.0
        %952 = vmatprep.subr.mxu0 0.0
        %953 = vmatpush1.msra.mxu0 0.0
        %954 = vmatprep.subr.mxu0 0.0
        %955 = vmatpush1.msra.mxu0 0.0
        %956 = vmatprep.subr.mxu0 0.0
        %957 = vmatpush1.msra.mxu0 0.0
        %958 = vmatprep.subr.mxu0 0.0
        %959 = vmatpush1.msra.mxu0 0.0
        %960 = vmatprep.subr.mxu0 0.0
        %961 = vmatpush1.msra.mxu0 0.0
        %962 = vmatprep.subr.mxu0 0.0
        %963 = vmatpush1.msra.mxu0 0.0
        %964 = vmatprep.subr.mxu0 0.0
        %965 = vmatpush1.msra.mxu0 0.0
        %966 = vmatprep.subr.mxu0 0.0
        %967 = vmatpush1.msra.mxu0 0.0
        %968 = vmatprep.subr.mxu0 0.0
        %969 = vmatpush1.msra.mxu0 0.0
        %970 = vmatprep.subr.mxu0 0.0
        %971 = vmatpush1.msra.mxu0 0.0
        %972 = vmatprep.subr.mxu0 0.0
        %973 = vmatpush1.msra.mxu0 0.0
        %974 = vmatprep.subr.mxu0 0.0
        %975 = vmatpush1.msra.mxu0 0.0
        %976 = vmatprep.subr.mxu0 0.0
        %977 = vmatpush1.msra.mxu0 0.0
        %978 = vmatprep.mubr.f32.mxu0 0.0
        %979 = vmatmul.mubr.f32.gmra.mrb[0].mxu0 %v912
        %v980 = vpop.f32.mrb[0].mxu0
        %v981 = vadd.f32 %v909, %v980
        %v982 = vpop.f32.mrb[0].mxu0
        %v983 = vadd.f32 %v909, %v982
        %984 = vdwg.mxu0
        %v985 = vmax.f32 %v981, 0.0
        %v986 = vmax.f32 %v983, 0.0
        %987 = vst [vmem:[%s336] sm:$0xff] %v985
        %988 = vst [vmem:[%s336 + $0x8] sm:$0xff] %v986
        %s989 = sand.u32 %s208, 1
        %s990 = scalar_lea.sflag [#allocation5], %s989
        %s991 = sand.u32 %s208, 1
        %s992 = smul.addr %s991, 16
        %s993 = scalar_lea.vmem [#allocation4], %s992
        %s994 = sand.u32 %s234, 1
        %s995 = scalar_lea.sflag [#allocation7], %s994
        %s996 = sand.u32 %s234, 1
        %s997 = smul.addr %s996, 16
        %s998 = scalar_lea.vmem [#allocation6], %s997
        // Predicated region
        $region53: #{tpu_custom_call.1} parent=51 // pred_check
          %p999 = pneg %p218
        $region54: #{tpu_custom_call.1} parent=51 // pred_check_branch
          %1001 = sbr.rel (%p999) target = $region56
        $region55: #{tpu_custom_call.1} parent=51 // pred_region
          %s1003 = ssub.s32 256, 256
          %1004 = vsyncadd %s990, %s1003
          %s1005 = smul.addr %s27, 2
          %s1006 = smul.addr %s1005, 128
          %s1007 = scalar_lea.hbm %s8, %s1006
          %s1009 = sshll.u32 %s993, 4
          %s1010 = int_to_ptr.vmem [resolvable:$true] %s1009
          %1012 = dma.vmem_to_hbm [thread:$0]  %s1010, 256, %s1007, %s990
        $region56: #{tpu_custom_call.1} parent=51 // pred_fallthru
          _
        // Predicated region
        $region57: #{tpu_custom_call.1} parent=51 // pred_check
          %p1013 = pneg %p244
        $region58: #{tpu_custom_call.1} parent=51 // pred_check_branch
          %1015 = sbr.rel (%p1013) target = $region60
        $region59: #{tpu_custom_call.1} parent=51 // pred_region
          %s1017 = ssub.s32 256, 256
          %1018 = vsyncadd %s995, %s1017
          %s1019 = smul.addr %s27, 2
          %s1020 = smul.addr %s1019, 128
          %s1021 = scalar_lea.hbm %s9, %s1020
          %s1023 = sshll.u32 %s998, 4
          %s1024 = int_to_ptr.vmem [resolvable:$true] %s1023
          %1026 = dma.vmem_to_hbm [thread:$0]  %s1024, 256, %s1021, %s995
        $region60: #{tpu_custom_call.1} parent=51 // pred_fallthru
          _
      $region52: #{tpu_custom_call.1} parent=5 // pred_fallthru
        _
      %p1027 = scmp.le.s32.totalorder 2, %s22
      // Predicated region
      $region61: #{tpu_custom_call.1} parent=5 // pred_check
        %p1028 = pneg %p1027
      $region62: #{tpu_custom_call.1} parent=5 // pred_check_branch
        %1030 = sbr.rel (%p1028) target = $region64
      $region63: #{tpu_custom_call.1} parent=5 // pred_region
        %s1031 = ssub.s32 %s22, 2
        // Predicated region
        $region65: #{tpu_custom_call.1} parent=63 // pred_check
          %p1032 = pneg %p224
        $region66: #{tpu_custom_call.1} parent=63 // pred_check_branch
          %1034 = sbr.rel (%p1032) target = $region68
        $region67: #{tpu_custom_call.1} parent=63 // pred_region
          %s1035 = sand.u32 %s209, 1
          %s1036 = scalar_lea.sflag [#allocation5], %s1035
          %s1037 = sand.u32 %s209, 1
          %s1038 = smul.addr %s1037, 16
          %s1039 = scalar_lea.vmem [#allocation4], %s1038
          %1040 = dma.done %s1036, 256
        $region68: #{tpu_custom_call.1} parent=63 // pred_fallthru
          _
        // Predicated region
        $region69: #{tpu_custom_call.1} parent=63 // pred_check
          %p1041 = pneg %p250
        $region70: #{tpu_custom_call.1} parent=63 // pred_check_branch
          %1043 = sbr.rel (%p1041) target = $region72
        $region71: #{tpu_custom_call.1} parent=63 // pred_region
          %s1044 = sand.u32 %s235, 1
          %s1045 = scalar_lea.sflag [#allocation7], %s1044
          %s1046 = sand.u32 %s235, 1
          %s1047 = smul.addr %s1046, 16
          %s1048 = scalar_lea.vmem [#allocation6], %s1047
          %1049 = dma.done %s1045, 256
        $region72: #{tpu_custom_call.1} parent=63 // pred_fallthru
          _
      $region64: #{tpu_custom_call.1} parent=5 // pred_fallthru
        _
    $region6: #{tpu_custom_call.1} parent=1 // loop_footer
      %s26 = sadd.s32 1, %s22
    $region7: #{tpu_custom_call.1} parent=1 // loop_footer_branch
      %21 = sbr.rel target = $region3
    $region8: #{tpu_custom_call.1} parent=1 // loop_exit
      _
    %1050 = vsyncpa [#allocation5], 1
    %s1051 = scalar_lea.sflag [#allocation5], 1
    %1052 = vsyncpa %s1051, 1
    %1053 = vsyncpa [#allocation7], 1
    %s1054 = scalar_lea.sflag [#allocation7], 1
    %1055 = vsyncpa %s1054, 1

</llo_original>
